<compile_context>
chip_gen: v7x
topology: tpu7x:2x2x1
jax: 0.10.0
libtpu: 0.0.40
codegen_flags: <defaults>
</compile_context>

<pallas_src>
import math

import jax
import jax.numpy as jnp
from jax.experimental import pallas as pl
from jax.experimental.pallas import tpu as pltpu

_LOG_2PI = math.log(2.0 * math.pi)


def _gaussian_embedding_kernel(x_ref, means_ref, norm_ref, inv_norm_ref, out_ref):
    # x_ref:        (1, TILE_N)  f32   positions on lanes
    # means_ref:    (K, 1)       f32   resident block (states on sublanes)
    # norm_ref:     (K, 1)       f32   resident block (precomputed in wrapper)
    # inv_norm_ref: (K, 1)       f32   resident block (precomputed in wrapper)
    # out_ref:      (K, TILE_N)  out_dtype, lane-dense output tile
    x = x_ref[...]                                    # (1, T)
    diff = x - means_ref[...]                         # broadcast -> (K, T)
    res = norm_ref[...] + (diff * diff) * inv_norm_ref[...]   # pure VPU mul/add
    out_ref[...] = res.astype(out_ref.dtype)          # store-side cast (f32 or bf16)


def _pick_tile_n(N, K, max_tile_n, vmem_budget_bytes):
    """Largest lane-tile (multiple of 128) under a K-aware VMEM budget.

    Per-step double-buffered VMEM ~ 2 * 4B * tile_n * (8 + K_pad8):
      - the (1, tile_n) x block pads to 8 sublanes,
      - the (K, tile_n) output block rounds K up to a sublane multiple of 8.
    Prefers a tile that divides N exactly so the wrapper never has to pad x
    (jnp.pad materializes a full copy) or slice the output.
    """
    k_pad = ((K + 7) // 8) * 8
    per_lane_bytes = 2 * 4 * (8 + k_pad)
    cap = max(128, (vmem_budget_bytes // per_lane_bytes) // 128 * 128)
    cap = min(cap, max(128, (max_tile_n // 128) * 128))
    n_ceil = pl.cdiv(N, 128) * 128
    if n_ceil <= cap:
        return n_ceil                     # single tile covers everything
    t = cap
    while t >= 128:
        if N % t == 0:
            return t                      # exact divisor -> no pad, no slice
        t -= 128
    return cap                            # fall back: pad the tail


def gaussian_embedding(x, means, log_vars, *, out_dtype=jnp.float32,
                       state_major=False, max_tile_n=65536,
                       vmem_budget_bytes=12 * 1024 * 1024):
    """GaussianEmbedding forward.

    x: (B, S, 1) f32; means, log_vars: (K,) f32.
    state_major=True  -> returns (K, B, S): no transpose, recommended layout
                         when the embedding feeds a contraction over K.
    state_major=False -> returns (B, S, K): module-faithful layout (pays one
                         XLA transpose outside the kernel).
    """
    B, S, one = x.shape
    assert one == 1, "GaussianEmbedding expects a trailing singleton feature dim"
    K = means.shape[0]
    N = B * S

    tile_n = _pick_tile_n(N, K, max_tile_n, vmem_budget_bytes)
    n_tiles = pl.cdiv(N, tile_n)
    n_pad = n_tiles * tile_n

    x_row = x.reshape(1, N).astype(jnp.float32)
    if n_pad != N:                        # only pad when strictly necessary
        x_row = jnp.pad(x_row, ((0, 0), (0, n_pad - N)))

    means_col = means.reshape(K, 1).astype(jnp.float32)
    lv = log_vars.astype(jnp.float32)
    # norm computed exactly as the PyTorch module (exp then log), K elems only.
    norm_col = (0.5 * jnp.log(2.0 * math.pi * jnp.exp(lv))).reshape(K, 1)
    inv_norm_col = 1.0 / norm_col

    out_itemsize = jnp.dtype(out_dtype).itemsize
    cost = pl.CostEstimate(
        flops=3 * N * K,
        transcendentals=0,
        bytes_accessed=4 * N + 4 * 3 * K + out_itemsize * N * K,
    )

    # Explicit VMEM limit: actual per-step need + headroom (portable across
    # v5e 16 MiB scoped default / v6e 32 MiB / v7x 64 MiB physical).
    k_pad = ((K + 7) // 8) * 8
    per_step_bytes = 2 * 4 * tile_n * (8 + k_pad) + (64 << 10)
    vmem_limit = int(min(max(per_step_bytes * 5 // 4, 4 << 20), 48 << 20))

    out_kn = pl.pallas_call(
        _gaussian_embedding_kernel,
        out_shape=jax.ShapeDtypeStruct((K, n_pad), out_dtype),
        grid_spec=pltpu.PrefetchScalarGridSpec(
            num_scalar_prefetch=0,
            grid=(n_tiles,),
            in_specs=[
                pl.BlockSpec((1, tile_n), lambda i: (0, i)),   # x tile
                pl.BlockSpec((K, 1), lambda i: (0, 0)),        # means (resident)
                pl.BlockSpec((K, 1), lambda i: (0, 0)),        # norm (resident)
                pl.BlockSpec((K, 1), lambda i: (0, 0)),        # 1/norm (resident)
            ],
            out_specs=pl.BlockSpec((K, tile_n), lambda i: (0, i)),
        ),
        compiler_params=pltpu.CompilerParams(
            # On v7x, flip to pltpu.CORE_PARALLEL if a profile shows a TC idle.
            dimension_semantics=("parallel",),
            vmem_limit_bytes=vmem_limit,
        ),
        cost_estimate=cost,
    )(x_row, means_col, norm_col, inv_norm_col)

    if n_pad != N:
        out_kn = out_kn[:, :N]

    if state_major:
        # (K, N) -> (K, B, S): pure reshape, zero extra HBM traffic.
        return out_kn.reshape(K, B, S)
    # Module-faithful (B, S, K): the one remaining XLA transpose lives here.
    return out_kn.T.reshape(B, S, K)


def _reference(x, means, log_vars):
    # Mirrors the PyTorch module exactly (exp then log, true divide).
    variances = jnp.exp(log_vars)
    norm = 0.5 * jnp.log(2.0 * math.pi * variances)
    return norm + (x - means) ** 2 / norm


if __name__ == "__main__":
    # Small, deterministic shapes consistent with the module's forward.
    batch, seq, num_states = 2, 8, 8

    key = jax.random.PRNGKey(0)
    x = jax.random.normal(key, (batch, seq, 1), dtype=jnp.float32)

    # Deterministic synthetic parameter init (no checkpoint load):
    #   means: evenly spaced over [-1, 1]; stds: 0.5 + 0.1*k
    means = jnp.linspace(-1.0, 1.0, num_states, dtype=jnp.float32)
    stds = 0.5 + 0.1 * jnp.arange(num_states, dtype=jnp.float32)
    log_vars = 2.0 * jnp.log(stds)

    ref = _reference(x, means, log_vars)
    ref_kbs = jnp.moveaxis(ref, -1, 0)

    # Fast path (review-recommended): state-major (K, B, S), no transpose.
    out_kbs = jax.block_until_ready(
        gaussian_embedding(x, means, log_vars, state_major=True))
    assert out_kbs.shape == (num_states, batch, seq)
    assert jnp.allclose(out_kbs, ref_kbs, atol=1e-5, rtol=1e-5), "state-major mismatch"

    # Module-faithful (B, S, K) layout.
    out_bsk = jax.block_until_ready(gaussian_embedding(x, means, log_vars))
    assert out_bsk.shape == (batch, seq, num_states)
    assert jnp.allclose(out_bsk, ref, atol=1e-5, rtol=1e-5), "(B,S,K) mismatch"

    # Optional bf16 writeback (halves HBM writeback bytes; compute stays f32).
    out_bf16 = jax.block_until_ready(
        gaussian_embedding(x, means, log_vars, state_major=True,
                           out_dtype=jnp.bfloat16))
    assert out_bf16.dtype == jnp.bfloat16
    assert jnp.allclose(out_bf16.astype(jnp.float32), ref_kbs,
                        atol=3e-2, rtol=3e-2), "bf16 mismatch"

    print("KERNEL_OK")
</pallas_src>

<mosaic_0001>
module attributes {stable_mosaic.version = 11 : i64} {
  func.func @_gaussian_embedding_kernel(%arg0: i32, %arg1: memref<1x128xf32, #tpu.memory_space<vmem>>, %arg2: memref<8x1xf32, #tpu.memory_space<vmem>>, %arg3: memref<8x1xf32, #tpu.memory_space<vmem>>, %arg4: memref<8x1xf32, #tpu.memory_space<vmem>>, %arg5: memref<8x128xf32, #tpu.memory_space<vmem>>) attributes {dimension_semantics = [#tpu.dimension_semantics<parallel>], iteration_bounds = array<i64: 1>, scalar_prefetch = 0 : i64, scratch_operands = 0 : i64, tpu.core_type = #tpu.core_type<tc>, window_params = [{transform_indices = @transform_0, window_bounds = array<i64: 1, 128>}, {pipeline_mode = #tpu.pipeline_mode<synchronous>, transform_indices = @transform_1, window_bounds = array<i64: 8, 1>}, {pipeline_mode = #tpu.pipeline_mode<synchronous>, transform_indices = @transform_2, window_bounds = array<i64: 8, 1>}, {pipeline_mode = #tpu.pipeline_mode<synchronous>, transform_indices = @transform_3, window_bounds = array<i64: 8, 1>}, {transform_indices = @transform_4, window_bounds = array<i64: 8, 128>}]} {
    %c0 = arith.constant 0 : index
    %c0_0 = arith.constant 0 : index
    %0 = vector.load %arg1[%c0, %c0_0] : memref<1x128xf32, #tpu.memory_space<vmem>>, vector<1x128xf32>
    %c0_1 = arith.constant 0 : index
    %c0_2 = arith.constant 0 : index
    %1 = vector.load %arg2[%c0_1, %c0_2] : memref<8x1xf32, #tpu.memory_space<vmem>>, vector<8x1xf32>
    %2 = vector.broadcast %0 : vector<1x128xf32> to vector<8x128xf32>
    %3 = vector.broadcast %1 : vector<8x1xf32> to vector<8x128xf32>
    %4 = arith.subf %2, %3 : vector<8x128xf32>
    %c0_3 = arith.constant 0 : index
    %c0_4 = arith.constant 0 : index
    %5 = vector.load %arg3[%c0_3, %c0_4] : memref<8x1xf32, #tpu.memory_space<vmem>>, vector<8x1xf32>
    %6 = arith.mulf %4, %4 : vector<8x128xf32>
    %c0_5 = arith.constant 0 : index
    %c0_6 = arith.constant 0 : index
    %7 = vector.load %arg4[%c0_5, %c0_6] : memref<8x1xf32, #tpu.memory_space<vmem>>, vector<8x1xf32>
    %8 = vector.broadcast %7 : vector<8x1xf32> to vector<8x128xf32>
    %9 = arith.mulf %6, %8 : vector<8x128xf32>
    %10 = vector.broadcast %5 : vector<8x1xf32> to vector<8x128xf32>
    %11 = arith.addf %10, %9 : vector<8x128xf32>
    %c0_7 = arith.constant 0 : index
    %c0_8 = arith.constant 0 : index
    %12 = vector.load %arg5[%c0_7, %c0_8] : memref<8x128xf32, #tpu.memory_space<vmem>>, vector<8x128xf32>
    tpu.vector_store %arg5[%c0_7, %c0_8], %11 {strides = array<i32>} : memref<8x128xf32, #tpu.memory_space<vmem>>, vector<8x128xf32>,
    return
  }
  func.func @transform_0(%arg0: i32) -> (i32, i32) {
    %c0_i32 = arith.constant 0 : i32
    %c0_i32_0 = arith.constant 0 : i32
    return %c0_i32, %arg0 : i32, i32
  }
  func.func @transform_1(%arg0: i32) -> (i32, i32) {
    %c0_i32 = arith.constant 0 : i32
    %c0_i32_0 = arith.constant 0 : i32
    %c0_i32_1 = arith.constant 0 : i32
    return %c0_i32, %c0_i32_0 : i32, i32
  }
  func.func @transform_2(%arg0: i32) -> (i32, i32) {
    %c0_i32 = arith.constant 0 : i32
    %c0_i32_0 = arith.constant 0 : i32
    %c0_i32_1 = arith.constant 0 : i32
    return %c0_i32, %c0_i32_0 : i32, i32
  }
  func.func @transform_3(%arg0: i32) -> (i32, i32) {
    %c0_i32 = arith.constant 0 : i32
    %c0_i32_0 = arith.constant 0 : i32
    %c0_i32_1 = arith.constant 0 : i32
    return %c0_i32, %c0_i32_0 : i32, i32
  }
  func.func @transform_4(%arg0: i32) -> (i32, i32) {
    %c0_i32 = arith.constant 0 : i32
    %c0_i32_0 = arith.constant 0 : i32
    return %c0_i32, %arg0 : i32, i32
  }
}

</mosaic_0001>

<llo_original>
// kernel: tpu_custom_call.1
$region0: #{tpu_custom_call.1}
  #allocation0 [shape = 'u32[]', space=smem, size = 0x4, offset = 0x4, fixed_abs, tag = 'smem constant byte address 0x4 - core index']
  #allocation1 [shape = 'u32[144,128]{1,0:T(1,128)}', space=vmem, size = 0x12000, scoped, tag = 'internal scratch']
  %s0 = inlined_call_operand.vmem [shape: f32[1,128], index: 0, kind: input, shape index: {}]
  %s1 = inlined_call_operand.vmem [shape: f32[8,1], index: 1, kind: input, shape index: {}]
  %s2 = inlined_call_operand.vmem [shape: f32[8,1], index: 2, kind: input, shape index: {}]
  %s3 = inlined_call_operand.vmem [shape: f32[8,1], index: 3, kind: input, shape index: {}]
  %s4 = inlined_call_operand.hbm [shape: f32[8,128], index: 4, kind: output, shape index: {}]
  %s5 = sld [smem:[#allocation0]]
  $region26: #{tpu_custom_call.1} parent=0
    _
  %s7 = ssub.s32 1, %s5
  %s8 = scalar_select 0, %s7, %s5
  $region1: #{tpu_custom_call.1} parent=0
    #allocation2 [shape = 'u8[4096]{0}', space=vmem, size = 0x1000, scoped, tag = 'output window, operand 0, single buffered']
    #allocation3 [shape = 's32[1]{0}', space=sflag, size = 0x4, scoped, tag = 'scoped memory for tpu_custom_call.1']
    %9 = vsyncpa [#allocation3], 0
    // Predicated region
    $region2: #{tpu_custom_call.1} parent=1 // pred_check
      _
    $region3: #{tpu_custom_call.1} parent=1 // pred_check_branch
      %11 = sbr.rel (0) target = $region5
    $region4: #{tpu_custom_call.1} parent=1 // pred_region
      _
    $region5: #{tpu_custom_call.1} parent=1 // pred_fallthru
      _
    // Predicated region
    $region6: #{tpu_custom_call.1} parent=1 // pred_check
      _
    $region7: #{tpu_custom_call.1} parent=1 // pred_check_branch
      %13 = sbr.rel (0) target = $region9
    $region8: #{tpu_custom_call.1} parent=1 // pred_region
      _
    $region9: #{tpu_custom_call.1} parent=1 // pred_fallthru
      _
    // Predicated region
    $region10: #{tpu_custom_call.1} parent=1 // pred_check
      _
    $region11: #{tpu_custom_call.1} parent=1 // pred_check_branch
      %15 = sbr.rel (0) target = $region13
    $region12: #{tpu_custom_call.1} parent=1 // pred_region
      _
    $region13: #{tpu_custom_call.1} parent=1 // pred_fallthru
      _
    // Predicated region
    $region14: #{tpu_custom_call.1} parent=1 // pred_check
      _
    $region15: #{tpu_custom_call.1} parent=1 // pred_check_branch
      %17 = sbr.rel (0) target = $region17
    $region16: #{tpu_custom_call.1} parent=1 // pred_region
      _
    $region17: #{tpu_custom_call.1} parent=1 // pred_fallthru
      _
    %v18 = vld [vmem:[%s0] sm:$0x1]
    %v19 = vld [vmem:[%s1] sm:$0xff]
    %v21 = vlaneseq
    %v22 = vshrl.u32 %v21, 7
    %v23 = vsub.s32 0, %v22
    %v24 = vrot.slane %v18, %v23
    %27 = vset.pattern.permute.xlu0 0
    %28 = vperm.xlu0 %27, %v19
    %v29 = vpop.permute.xlu0 %28
    %v31 = vsub.f32 %v24, %v29
    %v32 = vld [vmem:[%s2] sm:$0xff]
    %v33 = vmul.f32 %v31, %v31
    %v34 = vld [vmem:[%s3] sm:$0xff]
    %36 = vset.pattern.permute.xlu0 0
    %37 = vperm.xlu0 %36, %v34
    %v38 = vpop.permute.xlu0 %37
    %v40 = vmul.f32 %v33, %v38
    %42 = vset.pattern.permute.xlu0 0
    %43 = vperm.xlu0 %42, %v32
    %v44 = vpop.permute.xlu0 %43
    %v46 = vadd.f32 %v44, %v40
    %47 = vst [vmem:[#allocation2] sm:$0xff] %v46
    // Predicated region
    $region18: #{tpu_custom_call.1} parent=1 // pred_check
      _
    $region19: #{tpu_custom_call.1} parent=1 // pred_check_branch
      %49 = sbr.rel (0) target = $region21
    $region20: #{tpu_custom_call.1} parent=1 // pred_region
      %s51 = ssub.s32 128, 128
      %52 = vsyncadd [#allocation3], %s51
      %s54 = sshll.u32 [#allocation2], 4
      %s55 = int_to_ptr.vmem [resolvable:$true] %s54
      %57 = dma.vmem_to_hbm [thread:$0]  %s55, 128, %s4, [#allocation3]
    $region21: #{tpu_custom_call.1} parent=1 // pred_fallthru
      _
    // Predicated region
    $region22: #{tpu_custom_call.1} parent=1 // pred_check
      _
    $region23: #{tpu_custom_call.1} parent=1 // pred_check_branch
      %59 = sbr.rel (0) target = $region25
    $region24: #{tpu_custom_call.1} parent=1 // pred_region
      %60 = dma.done [#allocation3], 128
    $region25: #{tpu_custom_call.1} parent=1 // pred_fallthru
      _
    %61 = vsyncpa [#allocation3], 1

</llo_original>
